<compile_context>
chip_gen: v7x
topology: tpu7x:2x2x1
jax: 0.10.0
libtpu: 0.0.40
codegen_flags: <defaults>
</compile_context>

<pallas_src>
import jax
import jax.numpy as jnp
from jax.experimental import pallas as pl
from jax.experimental.pallas import tpu as pltpu

NEG_SLOPE = 0.01  # nn.LeakyReLU() default negative_slope


def _leaky_relu(x):
    return jnp.where(x > 0, x, NEG_SLOPE * x)


def _mean_matrix(N, D):
    """(N*D, N*D) matrix: y = x @ M puts the ua-row mean (item row excluded)
    of every feature d into lane k*D + d for every chunk k."""
    w_row = jnp.where(jnp.arange(N) == 1, 0.0, 1.0 / (N - 1)).astype(jnp.float32)
    a_mat = jnp.tile(w_row[:, None], (1, N))                   # (N, N), col-constant
    return jnp.kron(a_mat, jnp.eye(D, dtype=jnp.float32))      # (N*D, N*D)


def _make_kernel(D):
    def kernel(emb_ref, m_ref, wt_ref, b_ref, ui_ref, aux_ref):
        """One grid step = TB batch rows, lane-folded.

        emb_ref: (TB, N*D)   folded embeddings (chunk 0 = user, 1 = item, 2.. = aux)
        m_ref  : (N*D, N*D)  mean/broadcast matrix (resident)
        wt_ref : (D, D)      trans_ui weight, pre-transposed (x @ W^T == x @ wt)
        b_ref  : (1, D)      trans_ui bias
        ui_ref : (TB, D)     Linear(u * i)
        aux_ref: (TB, A*D)   adj2 rows 1.. (folded)
        """
        x = emb_ref[...].astype(jnp.float32)                   # (TB, N*D)
        m = m_ref[...]

        # ---- base_mp #1: broadcast ua-mean via MXU, elementwise scale, LeakyReLU
        mu1 = jnp.dot(x, m, preferred_element_type=jnp.float32)
        adj = _leaky_relu(x * mu1)
        # TODO(synk): nn.Dropout omitted (eval-mode identity).

        # ---- base_mp #2 (item chunk carries garbage but has weight 0 in M)
        mu2 = jnp.dot(adj, m, preferred_element_type=jnp.float32)
        adj2 = _leaky_relu(adj * mu2)

        # aux output = adj2 of ua rows 1..A  == folded chunks 2..N-1
        aux_ref[...] = adj2[:, 2 * D:].astype(aux_ref.dtype)

        # ---- trans_ui(u * i): batch-fused (TB, D) @ (D, D) on the MXU
        ui = x[:, :D] * x[:, D:2 * D]
        ui_ref[...] = (jnp.dot(ui, wt_ref[...], preferred_element_type=jnp.float32)
                       + b_ref[...]).astype(ui_ref.dtype)

    return kernel


def basemean_w_id_2_4(embeddings, w, b, *, batch_tile=None):
    """embeddings: [B, N, D] (user, item, N-2 aux rows); w: [D, D]; b: [D]."""
    B, N, D = embeddings.shape
    assert N >= 3, "need at least user + item + one auxiliary embedding"
    A = N - 2                   # auxiliary rows per batch
    ND, AD = N * D, A * D

    x = embeddings.reshape(B, ND)            # contiguous -> free reshape, no copy pass
    m = _mean_matrix(N, D)
    wt = w.T.astype(jnp.float32)             # kernel computes v @ W^T as v @ wt
    br = b.reshape(1, D).astype(jnp.float32)

    if batch_tile is None:
        # ~512 rows amortizes per-step overhead; keep >=2 grid steps when the
        # batch allows it so both v7x TensorCores are used.
        if B >= 16:
            batch_tile = min(512, 8 * pl.cdiv(B, 16))
        else:
            batch_tile = 8 * pl.cdiv(B, 8)
    TB = batch_tile
    grid = (pl.cdiv(B, TB),)                 # ragged tail handled by partial blocks

    ui_out, aux_out = pl.pallas_call(
        _make_kernel(D),
        out_shape=(jax.ShapeDtypeStruct((B, D), embeddings.dtype),
                   jax.ShapeDtypeStruct((B, AD), embeddings.dtype)),
        grid_spec=pltpu.PrefetchScalarGridSpec(
            num_scalar_prefetch=0,
            grid=grid,
            in_specs=[
                pl.BlockSpec((TB, ND), lambda bi: (bi, 0)),     # folded embeddings
                pl.BlockSpec((ND, ND), lambda bi: (0, 0)),      # mean matrix (resident)
                pl.BlockSpec((D, D), lambda bi: (0, 0)),        # W^T (resident)
                pl.BlockSpec((1, D), lambda bi: (0, 0)),        # bias (resident)
            ],
            out_specs=[
                pl.BlockSpec((TB, D), lambda bi: (bi, 0)),      # ui_out
                pl.BlockSpec((TB, AD), lambda bi: (bi, 0)),     # aux rows (lane-dense)
            ],
        ),
        compiler_params=pltpu.CompilerParams(
            dimension_semantics=("parallel",)),
    )(x, m, wt, br)

    # Downstream consumers can keep the two outputs separate; concatenate here
    # only to match the module's (B, N-1, D) output exactly.
    return jnp.concatenate(
        [ui_out[:, None, :], aux_out.reshape(B, A, D)], axis=1)


def reference(embeddings, w, b):
    """Pure-JAX port of BaseMean_w_id_2_4.forward (eval mode)."""
    u = embeddings[:, 0:1, :]
    it = embeddings[:, 1:2, :]
    a = embeddings[:, 2:, :]
    ua = jnp.concatenate([u, a], axis=1)

    def base_mp(ems):
        mu = ems.mean(axis=1, keepdims=True)
        v = ems * mu
        return jnp.where(v > 0, v, NEG_SLOPE * v)

    adj = base_mp(ua)
    adj2 = base_mp(adj)
    ui_out = (u * it) @ w.T + b
    return jnp.concatenate([ui_out, adj2[:, 1:, :]], axis=1)


if __name__ == "__main__":
    # 1 user + 1 item + 8 auxiliary embeddings, em_dim = 32
    N, D = 10, 32
    key = jax.random.PRNGKey(0)
    k_emb, k_w, k_b, k_emb2 = jax.random.split(key, 4)

    bound = 1.0 / (D ** 0.5)
    w = jax.random.uniform(k_w, (D, D), minval=-bound, maxval=bound,
                           dtype=jnp.float32)
    b = jax.random.uniform(k_b, (D,), minval=-bound, maxval=bound,
                           dtype=jnp.float32)

    # Case 1: tiny batch (single partial block)
    B1 = 2
    emb1 = jax.random.normal(k_emb, (B1, N, D), dtype=jnp.float32)
    out1 = jax.block_until_ready(basemean_w_id_2_4(emb1, w, b))
    ref1 = reference(emb1, w, b)
    assert out1.shape == (B1, N - 1, D), out1.shape
    assert jnp.allclose(out1, ref1, atol=1e-5, rtol=1e-5)

    # Case 2: multi-step grid with a ragged tail (no wrapper padding)
    B2 = 20
    emb2 = jax.random.normal(k_emb2, (B2, N, D), dtype=jnp.float32)
    out2 = jax.block_until_ready(basemean_w_id_2_4(emb2, w, b))
    ref2 = reference(emb2, w, b)
    assert out2.shape == (B2, N - 1, D), out2.shape
    assert jnp.allclose(out2, ref2, atol=1e-5, rtol=1e-5)

    print("KERNEL_OK")
</pallas_src>

<mosaic_0001>
module attributes {stable_mosaic.version = 11 : i64} {
  func.func @kernel(%arg0: i32, %arg1: memref<8x320xf32, #tpu.memory_space<vmem>>, %arg2: memref<320x320xf32, #tpu.memory_space<vmem>>, %arg3: memref<32x32xf32, #tpu.memory_space<vmem>>, %arg4: memref<1x32xf32, #tpu.memory_space<vmem>>, %arg5: memref<8x32xf32, #tpu.memory_space<vmem>>, %arg6: memref<8x256xf32, #tpu.memory_space<vmem>>) attributes {dimension_semantics = [#tpu.dimension_semantics<parallel>], iteration_bounds = array<i64: 1>, scalar_prefetch = 0 : i64, scratch_operands = 0 : i64, tpu.core_type = #tpu.core_type<tc>, window_params = [{transform_indices = @transform_0, window_bounds = array<i64: 8, 320>}, {pipeline_mode = #tpu.pipeline_mode<synchronous>, transform_indices = @transform_1, window_bounds = array<i64: 320, 320>}, {pipeline_mode = #tpu.pipeline_mode<synchronous>, transform_indices = @transform_2, window_bounds = array<i64: 32, 32>}, {pipeline_mode = #tpu.pipeline_mode<synchronous>, transform_indices = @transform_3, window_bounds = array<i64: 1, 32>}, {transform_indices = @transform_4, window_bounds = array<i64: 8, 32>}, {transform_indices = @transform_5, window_bounds = array<i64: 8, 256>}]} {
    %c0 = arith.constant 0 : index
    %c0_0 = arith.constant 0 : index
    %0 = vector.load %arg1[%c0, %c0_0] : memref<8x320xf32, #tpu.memory_space<vmem>>, vector<8x320xf32>
    %c0_1 = arith.constant 0 : index
    %c0_2 = arith.constant 0 : index
    %1 = vector.load %arg2[%c0_1, %c0_2] : memref<320x320xf32, #tpu.memory_space<vmem>>, vector<320x320xf32>
    %cst = arith.constant dense<0.000000e+00> : vector<8x320xf32>
    %2 = tpu.matmul %0, %1, %cst {dimension_numbers = #tpu.dot_dimension_numbers<[1], [0], [0], [1], [0, 0, 1, 1], [], []>} : vector<8x320xf32>, vector<320x320xf32>, vector<8x320xf32> -> vector<8x320xf32>
    %3 = arith.mulf %0, %2 : vector<8x320xf32>
    %cst_3 = arith.constant 0.000000e+00 : f32
    %4 = vector.broadcast %cst_3 : f32 to vector<8x320xf32>
    %5 = arith.cmpf ogt, %3, %4 : vector<8x320xf32>
    %cst_4 = arith.constant 0.00999999977 : f32
    %6 = vector.broadcast %cst_4 : f32 to vector<8x320xf32>
    %7 = arith.mulf %6, %3 : vector<8x320xf32>
    %8 = arith.select %5, %3, %7 : vector<8x320xi1>, vector<8x320xf32>
    %cst_5 = arith.constant dense<0.000000e+00> : vector<8x320xf32>
    %9 = tpu.matmul %8, %1, %cst_5 {dimension_numbers = #tpu.dot_dimension_numbers<[1], [0], [0], [1], [0, 0, 1, 1], [], []>} : vector<8x320xf32>, vector<320x320xf32>, vector<8x320xf32> -> vector<8x320xf32>
    %10 = arith.mulf %8, %9 : vector<8x320xf32>
    %cst_6 = arith.constant 0.000000e+00 : f32
    %11 = vector.broadcast %cst_6 : f32 to vector<8x320xf32>
    %12 = arith.cmpf ogt, %10, %11 : vector<8x320xf32>
    %cst_7 = arith.constant 0.00999999977 : f32
    %13 = vector.broadcast %cst_7 : f32 to vector<8x320xf32>
    %14 = arith.mulf %13, %10 : vector<8x320xf32>
    %15 = arith.select %12, %10, %14 : vector<8x320xi1>, vector<8x320xf32>
    %16 = vector.extract_strided_slice %15 {offsets = [0, 64], sizes = [8, 256], strides = [1, 1]} : vector<8x320xf32> to vector<8x256xf32>
    %c0_8 = arith.constant 0 : index
    %c0_9 = arith.constant 0 : index
    %17 = vector.load %arg6[%c0_8, %c0_9] : memref<8x256xf32, #tpu.memory_space<vmem>>, vector<8x256xf32>
    tpu.vector_store %arg6[%c0_8, %c0_9], %16 {strides = array<i32>} : memref<8x256xf32, #tpu.memory_space<vmem>>, vector<8x256xf32>,
    %18 = vector.extract_strided_slice %0 {offsets = [0, 0], sizes = [8, 32], strides = [1, 1]} : vector<8x320xf32> to vector<8x32xf32>
    %19 = vector.extract_strided_slice %0 {offsets = [0, 32], sizes = [8, 32], strides = [1, 1]} : vector<8x320xf32> to vector<8x32xf32>
    %20 = arith.mulf %18, %19 : vector<8x32xf32>
    %c0_10 = arith.constant 0 : index
    %c0_11 = arith.constant 0 : index
    %21 = vector.load %arg3[%c0_10, %c0_11] : memref<32x32xf32, #tpu.memory_space<vmem>>, vector<32x32xf32>
    %cst_12 = arith.constant dense<0.000000e+00> : vector<8x32xf32>
    %22 = tpu.matmul %20, %21, %cst_12 {dimension_numbers = #tpu.dot_dimension_numbers<[1], [0], [0], [1], [0, 0, 1, 1], [], []>} : vector<8x32xf32>, vector<32x32xf32>, vector<8x32xf32> -> vector<8x32xf32>
    %c0_13 = arith.constant 0 : index
    %c0_14 = arith.constant 0 : index
    %23 = vector.load %arg4[%c0_13, %c0_14] : memref<1x32xf32, #tpu.memory_space<vmem>>, vector<1x32xf32>
    %24 = vector.broadcast %23 : vector<1x32xf32> to vector<8x32xf32>
    %25 = arith.addf %22, %24 : vector<8x32xf32>
    %c0_15 = arith.constant 0 : index
    %c0_16 = arith.constant 0 : index
    %26 = vector.load %arg5[%c0_15, %c0_16] : memref<8x32xf32, #tpu.memory_space<vmem>>, vector<8x32xf32>
    tpu.vector_store %arg5[%c0_15, %c0_16], %25 {strides = array<i32>} : memref<8x32xf32, #tpu.memory_space<vmem>>, vector<8x32xf32>,
    return
  }
  func.func @transform_0(%arg0: i32) -> (i32, i32) {
    %c0_i32 = arith.constant 0 : i32
    %c0_i32_0 = arith.constant 0 : i32
    return %arg0, %c0_i32 : i32, i32
  }
  func.func @transform_1(%arg0: i32) -> (i32, i32) {
    %c0_i32 = arith.constant 0 : i32
    %c0_i32_0 = arith.constant 0 : i32
    %c0_i32_1 = arith.constant 0 : i32
    return %c0_i32, %c0_i32_0 : i32, i32
  }
  func.func @transform_2(%arg0: i32) -> (i32, i32) {
    %c0_i32 = arith.constant 0 : i32
    %c0_i32_0 = arith.constant 0 : i32
    %c0_i32_1 = arith.constant 0 : i32
    return %c0_i32, %c0_i32_0 : i32, i32
  }
  func.func @transform_3(%arg0: i32) -> (i32, i32) {
    %c0_i32 = arith.constant 0 : i32
    %c0_i32_0 = arith.constant 0 : i32
    %c0_i32_1 = arith.constant 0 : i32
    return %c0_i32, %c0_i32_0 : i32, i32
  }
  func.func @transform_4(%arg0: i32) -> (i32, i32) {
    %c0_i32 = arith.constant 0 : i32
    %c0_i32_0 = arith.constant 0 : i32
    return %arg0, %c0_i32 : i32, i32
  }
  func.func @transform_5(%arg0: i32) -> (i32, i32) {
    %c0_i32 = arith.constant 0 : i32
    %c0_i32_0 = arith.constant 0 : i32
    return %arg0, %c0_i32 : i32, i32
  }
}

</mosaic_0001>

<llo_original>
// kernel: tpu_custom_call.1
$region0: #{tpu_custom_call.1}
  #allocation0 [shape = 'u32[]', space=smem, size = 0x4, offset = 0x4, fixed_abs, tag = 'smem constant byte address 0x4 - core index']
  #allocation1 [shape = 'u32[144,128]{1,0:T(1,128)}', space=vmem, size = 0x12000, scoped, tag = 'internal scratch']
  %s0 = inlined_call_operand.hbm [shape: f32[2,320], index: 0, kind: input, shape index: {}]
  %s1 = inlined_call_operand.hbm [shape: f32[320,320], index: 1, kind: input, shape index: {}]
  %s2 = inlined_call_operand.hbm [shape: f32[32,32], index: 2, kind: input, shape index: {}]
  %s3 = inlined_call_operand.vmem [shape: f32[1,32], index: 3, kind: input, shape index: {}]
  %s4 = inlined_call_operand.hbm [shape: f32[2,32], index: 4, kind: output, shape index: {0}]
  %s5 = inlined_call_operand.hbm [shape: f32[2,256], index: 5, kind: output, shape index: {1}]
  %6 = xla_tuple %s4, %s5
  %s7 = sld [smem:[#allocation0]]
  $region46: #{tpu_custom_call.1} parent=0
    _
  %s9 = ssub.s32 1, %s7
  %s10 = scalar_select 0, %s9, %s7
  $region1: #{tpu_custom_call.1} parent=0
    #allocation2 [shape = 'u8[12288]{0}', space=vmem, size = 0x3000, scoped, tag = 'input window, operand 0, single buffered']
    #allocation3 [shape = 's32[1]{0}', space=sflag, size = 0x4, scoped, tag = 'scoped memory for tpu_custom_call.1']
    #allocation4 [shape = 's32[1]{0}', space=sflag, size = 0x4, scoped, tag = 'scoped memory for tpu_custom_call.1']
    #allocation5 [shape = 'u8[491520]{0}', space=vmem, size = 0x78000, scoped, tag = 'input window, operand 1, single buffered']
    #allocation6 [shape = 's32[1]{0}', space=sflag, size = 0x4, scoped, tag = 'scoped memory for tpu_custom_call.1']
    #allocation7 [shape = 'u8[16384]{0}', space=vmem, size = 0x4000, scoped, tag = 'input window, operand 2, single buffered']
    #allocation8 [shape = 'u8[4096]{0}', space=vmem, size = 0x1000, scoped, tag = 'output window, operand 0, single buffered']
    #allocation9 [shape = 'u8[8192]{0}', space=vmem, size = 0x2000, scoped, tag = 'output window, operand 1, single buffered']
    #allocation10 [shape = 's32[1]{0}', space=sflag, size = 0x4, scoped, tag = 'scoped memory for tpu_custom_call.1']
    %11 = vsyncpa [#allocation3], 0
    %12 = vsyncpa [#allocation6], 0
    %13 = vsyncpa [#allocation4], 0
    %14 = vsyncpa [#allocation10], 0
    // Predicated region
    $region2: #{tpu_custom_call.1} parent=1 // pred_check
      _
    $region3: #{tpu_custom_call.1} parent=1 // pred_check_branch
      %16 = sbr.rel (0) target = $region5
    $region4: #{tpu_custom_call.1} parent=1 // pred_region
      %s18 = ssub.s32 384, 96
      %19 = vsyncadd [#allocation3], %s18
      %s20 = sshll.u32 [#allocation2], 4
      %s21 = int_to_ptr.vmem [resolvable:$true] %s20
      %26 = dma.hbm_to_vmem [thread:$0]  %s0, 96, %s21, [#allocation3], 96, 96, 6
    $region5: #{tpu_custom_call.1} parent=1 // pred_fallthru
      _
    // Predicated region
    $region6: #{tpu_custom_call.1} parent=1 // pred_check
      _
    $region7: #{tpu_custom_call.1} parent=1 // pred_check_branch
      %28 = sbr.rel (0) target = $region9
    $region8: #{tpu_custom_call.1} parent=1 // pred_region
      %s30 = ssub.s32 15360, 15360
      %31 = vsyncadd [#allocation6], %s30
      %s32 = sshll.u32 [#allocation5], 4
      %s33 = int_to_ptr.vmem [resolvable:$true] %s32
      %38 = dma.hbm_to_vmem [thread:$0]  %s1, 15360, %s33, [#allocation6], 384, 384, 24
    $region9: #{tpu_custom_call.1} parent=1 // pred_fallthru
      _
    // Predicated region
    $region10: #{tpu_custom_call.1} parent=1 // pred_check
      _
    $region11: #{tpu_custom_call.1} parent=1 // pred_check_branch
      %40 = sbr.rel (0) target = $region13
    $region12: #{tpu_custom_call.1} parent=1 // pred_region
      %s42 = ssub.s32 512, 512
      %43 = vsyncadd [#allocation6], %s42
      %s44 = sshll.u32 [#allocation7], 4
      %s45 = int_to_ptr.vmem [resolvable:$true] %s44
      %50 = dma.hbm_to_vmem [thread:$0]  %s2, 512, %s45, [#allocation6], 128, 128, 8
    $region13: #{tpu_custom_call.1} parent=1 // pred_fallthru
      _
    // Predicated region
    $region14: #{tpu_custom_call.1} parent=1 // pred_check
      _
    $region15: #{tpu_custom_call.1} parent=1 // pred_check_branch
      %52 = sbr.rel (0) target = $region17
    $region16: #{tpu_custom_call.1} parent=1 // pred_region
      _
    $region17: #{tpu_custom_call.1} parent=1 // pred_fallthru
      _
    // Predicated region
    $region18: #{tpu_custom_call.1} parent=1 // pred_check
      _
    $region19: #{tpu_custom_call.1} parent=1 // pred_check_branch
      %54 = sbr.rel (0) target = $region21
    $region20: #{tpu_custom_call.1} parent=1 // pred_region
      %55 = dma.done [#allocation3], 384
    $region21: #{tpu_custom_call.1} parent=1 // pred_fallthru
      _
    // Predicated region
    $region22: #{tpu_custom_call.1} parent=1 // pred_check
      _
    $region23: #{tpu_custom_call.1} parent=1 // pred_check_branch
      %57 = sbr.rel (0) target = $region25
    $region24: #{tpu_custom_call.1} parent=1 // pred_region
      %58 = dma.done [#allocation6], 15360
    $region25: #{tpu_custom_call.1} parent=1 // pred_fallthru
      _
    // Predicated region
    $region26: #{tpu_custom_call.1} parent=1 // pred_check
      _
    $region27: #{tpu_custom_call.1} parent=1 // pred_check_branch
      %60 = sbr.rel (0) target = $region29
    $region28: #{tpu_custom_call.1} parent=1 // pred_region
      %61 = dma.done [#allocation6], 512
    $region29: #{tpu_custom_call.1} parent=1 // pred_fallthru
      _
    %v62 = vld [vmem:[#allocation2] sm:$0x3f]
    %v63 = vld [vmem:[#allocation2 + $0x6] sm:$0x3f]
    %v64 = vld [vmem:[#allocation2 + $0xc] sm:$0x3f]
    %v65 = vld [vmem:[#allocation2 + $0x12] sm:$0x3f]
    %v66 = vld [vmem:[#allocation5] sm:$0xff]
    %v67 = vld [vmem:[#allocation5 + $0x8] sm:$0xff]
    %v68 = vld [vmem:[#allocation5 + $0x10] sm:$0xff]
    %v69 = vld [vmem:[#allocation5 + $0x18] sm:$0xff]
    %v70 = vld [vmem:[#allocation5 + $0x20] sm:$0xff]
    %v71 = vld [vmem:[#allocation5 + $0x28] sm:$0xff]
    %v72 = vld [vmem:[#allocation5 + $0x30] sm:$0xff]
    %v73 = vld [vmem:[#allocation5 + $0x38] sm:$0xff]
    %v74 = vld [vmem:[#allocation5 + $0x40] sm:$0xff]
    %v75 = vld [vmem:[#allocation5 + $0x48] sm:$0xff]
    %v76 = vld [vmem:[#allocation5 + $0x50] sm:$0xff]
    %v77 = vld [vmem:[#allocation5 + $0x58] sm:$0xff]
    %v78 = vld [vmem:[#allocation5 + $0x60] sm:$0xff]
    %v79 = vld [vmem:[#allocation5 + $0x68] sm:$0xff]
    %v80 = vld [vmem:[#allocation5 + $0x70] sm:$0xff]
    %v81 = vld [vmem:[#allocation5 + $0x78] sm:$0xff]
    %v82 = vld [vmem:[#allocation5 + $0x80] sm:$0xff]
    %v83 = vld [vmem:[#allocation5 + $0x88] sm:$0xff]
    %v84 = vld [vmem:[#allocation5 + $0x90] sm:$0xff]
    %v85 = vld [vmem:[#allocation5 + $0x98] sm:$0xff]
    %v86 = vld [vmem:[#allocation5 + $0xa0] sm:$0xff]
    %v87 = vld [vmem:[#allocation5 + $0xa8] sm:$0xff]
    %v88 = vld [vmem:[#allocation5 + $0xb0] sm:$0xff]
    %v89 = vld [vmem:[#allocation5 + $0xb8] sm:$0xff]
    %v90 = vld [vmem:[#allocation5 + $0xc0] sm:$0xff]
    %v91 = vld [vmem:[#allocation5 + $0xc8] sm:$0xff]
    %v92 = vld [vmem:[#allocation5 + $0xd0] sm:$0xff]
    %v93 = vld [vmem:[#allocation5 + $0xd8] sm:$0xff]
    %v94 = vld [vmem:[#allocation5 + $0xe0] sm:$0xff]
    %v95 = vld [vmem:[#allocation5 + $0xe8] sm:$0xff]
    %v96 = vld [vmem:[#allocation5 + $0xf0] sm:$0xff]
    %v97 = vld [vmem:[#allocation5 + $0xf8] sm:$0xff]
    %v98 = vld [vmem:[#allocation5 + $0x100] sm:$0xff]
    %v99 = vld [vmem:[#allocation5 + $0x108] sm:$0xff]
    %v100 = vld [vmem:[#allocation5 + $0x110] sm:$0xff]
    %v101 = vld [vmem:[#allocation5 + $0x118] sm:$0xff]
    %v102 = vld [vmem:[#allocation5 + $0x120] sm:$0xff]
    %v103 = vld [vmem:[#allocation5 + $0x128] sm:$0xff]
    %v104 = vld [vmem:[#allocation5 + $0x130] sm:$0xff]
    %v105 = vld [vmem:[#allocation5 + $0x138] sm:$0xff]
    %v106 = vld [vmem:[#allocation5 + $0x140] sm:$0xff]
    %v107 = vld [vmem:[#allocation5 + $0x148] sm:$0xff]
    %v108 = vld [vmem:[#allocation5 + $0x150] sm:$0xff]
    %v109 = vld [vmem:[#allocation5 + $0x158] sm:$0xff]
    %v110 = vld [vmem:[#allocation5 + $0x160] sm:$0xff]
    %v111 = vld [vmem:[#allocation5 + $0x168] sm:$0xff]
    %v112 = vld [vmem:[#allocation5 + $0x170] sm:$0xff]
    %v113 = vld [vmem:[#allocation5 + $0x178] sm:$0xff]
    %v114 = vld [vmem:[#allocation5 + $0x180] sm:$0xff]
    %v115 = vld [vmem:[#allocation5 + $0x188] sm:$0xff]
    %v116 = vld [vmem:[#allocation5 + $0x190] sm:$0xff]
    %v117 = vld [vmem:[#allocation5 + $0x198] sm:$0xff]
    %v118 = vld [vmem:[#allocation5 + $0x1a0] sm:$0xff]
    %v119 = vld [vmem:[#allocation5 + $0x1a8] sm:$0xff]
    %v120 = vld [vmem:[#allocation5 + $0x1b0] sm:$0xff]
    %v121 = vld [vmem:[#allocation5 + $0x1b8] sm:$0xff]
    %v122 = vld [vmem:[#allocation5 + $0x1c0] sm:$0xff]
    %v123 = vld [vmem:[#allocation5 + $0x1c8] sm:$0xff]
    %v124 = vld [vmem:[#allocation5 + $0x1d0] sm:$0xff]
    %v125 = vld [vmem:[#allocation5 + $0x1d8] sm:$0xff]
    %v126 = vld [vmem:[#allocation5 + $0x1e0] sm:$0xff]
    %v127 = vld [vmem:[#allocation5 + $0x1e8] sm:$0xff]
    %v128 = vld [vmem:[#allocation5 + $0x1f0] sm:$0xff]
    %v129 = vld [vmem:[#allocation5 + $0x1f8] sm:$0xff]
    %v130 = vld [vmem:[#allocation5 + $0x200] sm:$0xff]
    %v131 = vld [vmem:[#allocation5 + $0x208] sm:$0xff]
    %v132 = vld [vmem:[#allocation5 + $0x210] sm:$0xff]
    %v133 = vld [vmem:[#allocation5 + $0x218] sm:$0xff]
    %v134 = vld [vmem:[#allocation5 + $0x220] sm:$0xff]
    %v135 = vld [vmem:[#allocation5 + $0x228] sm:$0xff]
    %v136 = vld [vmem:[#allocation5 + $0x230] sm:$0xff]
    %v137 = vld [vmem:[#allocation5 + $0x238] sm:$0xff]
    %v138 = vld [vmem:[#allocation5 + $0x240] sm:$0xff]
    %v139 = vld [vmem:[#allocation5 + $0x248] sm:$0xff]
    %v140 = vld [vmem:[#allocation5 + $0x250] sm:$0xff]
    %v141 = vld [vmem:[#allocation5 + $0x258] sm:$0xff]
    %v142 = vld [vmem:[#allocation5 + $0x260] sm:$0xff]
    %v143 = vld [vmem:[#allocation5 + $0x268] sm:$0xff]
    %v144 = vld [vmem:[#allocation5 + $0x270] sm:$0xff]
    %v145 = vld [vmem:[#allocation5 + $0x278] sm:$0xff]
    %v146 = vld [vmem:[#allocation5 + $0x280] sm:$0xff]
    %v147 = vld [vmem:[#allocation5 + $0x288] sm:$0xff]
    %v148 = vld [vmem:[#allocation5 + $0x290] sm:$0xff]
    %v149 = vld [vmem:[#allocation5 + $0x298] sm:$0xff]
    %v150 = vld [vmem:[#allocation5 + $0x2a0] sm:$0xff]
    %v151 = vld [vmem:[#allocation5 + $0x2a8] sm:$0xff]
    %v152 = vld [vmem:[#allocation5 + $0x2b0] sm:$0xff]
    %v153 = vld [vmem:[#allocation5 + $0x2b8] sm:$0xff]
    %v154 = vld [vmem:[#allocation5 + $0x2c0] sm:$0xff]
    %v155 = vld [vmem:[#allocation5 + $0x2c8] sm:$0xff]
    %v156 = vld [vmem:[#allocation5 + $0x2d0] sm:$0xff]
    %v157 = vld [vmem:[#allocation5 + $0x2d8] sm:$0xff]
    %v158 = vld [vmem:[#allocation5 + $0x2e0] sm:$0xff]
    %v159 = vld [vmem:[#allocation5 + $0x2e8] sm:$0xff]
    %v160 = vld [vmem:[#allocation5 + $0x2f0] sm:$0xff]
    %v161 = vld [vmem:[#allocation5 + $0x2f8] sm:$0xff]
    %v162 = vld [vmem:[#allocation5 + $0x300] sm:$0xff]
    %v163 = vld [vmem:[#allocation5 + $0x308] sm:$0xff]
    %v164 = vld [vmem:[#allocation5 + $0x310] sm:$0xff]
    %v165 = vld [vmem:[#allocation5 + $0x318] sm:$0xff]
    %v166 = vld [vmem:[#allocation5 + $0x320] sm:$0xff]
    %v167 = vld [vmem:[#allocation5 + $0x328] sm:$0xff]
    %v168 = vld [vmem:[#allocation5 + $0x330] sm:$0xff]
    %v169 = vld [vmem:[#allocation5 + $0x338] sm:$0xff]
    %v170 = vld [vmem:[#allocation5 + $0x340] sm:$0xff]
    %v171 = vld [vmem:[#allocation5 + $0x348] sm:$0xff]
    %v172 = vld [vmem:[#allocation5 + $0x350] sm:$0xff]
    %v173 = vld [vmem:[#allocation5 + $0x358] sm:$0xff]
    %v174 = vld [vmem:[#allocation5 + $0x360] sm:$0xff]
    %v175 = vld [vmem:[#allocation5 + $0x368] sm:$0xff]
    %v176 = vld [vmem:[#allocation5 + $0x370] sm:$0xff]
    %v177 = vld [vmem:[#allocation5 + $0x378] sm:$0xff]
    %v178 = vld [vmem:[#allocation5 + $0x380] sm:$0xff]
    %v179 = vld [vmem:[#allocation5 + $0x388] sm:$0xff]
    %v180 = vld [vmem:[#allocation5 + $0x390] sm:$0xff]
    %v181 = vld [vmem:[#allocation5 + $0x398] sm:$0xff]
    %v182 = vld [vmem:[#allocation5 + $0x3a0] sm:$0xff]
    %v183 = vld [vmem:[#allocation5 + $0x3a8] sm:$0xff]
    %v184 = vld [vmem:[#allocation5 + $0x3b0] sm:$0xff]
    %v185 = vld [vmem:[#allocation5 + $0x3b8] sm:$0xff]
    %v190 = vcombine.low %v62, %v63
    %v191 = vcombine.high %v62, %v63
    %v192 = vcombine.low %v64, %v65
    %v193 = vcombine.high %v64, %v65
    %v195 = vunpack.c.l.s4 1983009808
    %v196 = vunpack.c.0.s8 %v195
    %v197 = vlaneseq
    %v198 = vshrl.u32 %v197, 7
    %v199 = vsub.s32 %v196, %v198
    %v200 = vrot.slane %v190, %v199
    %v202 = vunpack.c.l.s4 1983009808
    %v203 = vunpack.c.0.s8 %v202
    %v204 = vlaneseq
    %v205 = vshrl.u32 %v204, 7
    %v206 = vsub.s32 %v203, %v205
    %v207 = vrot.slane %v191, %v206
    %v209 = vunpack.c.l.s4 1983009808
    %v210 = vunpack.c.0.s8 %v209
    %v211 = vlaneseq
    %v212 = vshrl.u32 %v211, 7
    %v213 = vsub.s32 %v210, %v212
    %v214 = vrot.slane %v192, %v213
    %v216 = vunpack.c.l.s4 1983009808
    %v217 = vunpack.c.0.s8 %v216
    %v218 = vlaneseq
    %v219 = vshrl.u32 %v218, 7
    %v220 = vsub.s32 %v217, %v219
    %v221 = vrot.slane %v193, %v220
    %v222 = vcombine.low %v200, %v214
    %v223 = vcombine.high %v200, %v214
    %v224 = vcombine.low %v207, %v221
    %vm227 = vcmask 523264
    %v228 = vsel %vm227, %v224, 0
    %230 = vmatprep.subr.mxu0 %v67
    %231 = vmatpush1.msra.mxu0 %v66
    %232 = vmatprep.subr.mxu0 %v70
    %233 = vmatpush1.msra.mxu0 %v69
    %234 = vmatprep.subr.mxu0 %v73
    %235 = vmatpush1.msra.mxu0 %v72
    %236 = vmatprep.subr.mxu0 %v76
    %237 = vmatpush1.msra.mxu0 %v75
    %238 = vmatprep.subr.mxu0 %v79
    %239 = vmatpush1.msra.mxu0 %v78
    %240 = vmatprep.subr.mxu0 %v82
    %241 = vmatpush1.msra.mxu0 %v81
    %242 = vmatprep.subr.mxu0 %v85
    %243 = vmatpush1.msra.mxu0 %v84
    %244 = vmatprep.subr.mxu0 %v88
    %245 = vmatpush1.msra.mxu0 %v87
    %246 = vmatprep.subr.mxu0 %v91
    %247 = vmatpush1.msra.mxu0 %v90
    %248 = vmatprep.subr.mxu0 %v94
    %249 = vmatpush1.msra.mxu0 %v93
    %250 = vmatprep.subr.mxu0 %v97
    %251 = vmatpush1.msra.mxu0 %v96
    %252 = vmatprep.subr.mxu0 %v100
    %253 = vmatpush1.msra.mxu0 %v99
    %254 = vmatprep.subr.mxu0 %v103
    %255 = vmatpush1.msra.mxu0 %v102
    %256 = vmatprep.subr.mxu0 %v106
    %257 = vmatpush1.msra.mxu0 %v105
    %258 = vmatprep.subr.mxu0 %v109
    %259 = vmatpush1.msra.mxu0 %v108
    %260 = vmatprep.subr.mxu0 %v112
    %261 = vmatpush1.msra.mxu0 %v111
    %262 = vmatprep.subr.mxu0 %v115
    %263 = vmatpush1.msra.mxu0 %v114
    %264 = vmatprep.subr.mxu0 %v118
    %265 = vmatpush1.msra.mxu0 %v117
    %266 = vmatprep.subr.mxu0 %v121
    %267 = vmatpush1.msra.mxu0 %v120
    %268 = vmatprep.subr.mxu0 %v124
    %269 = vmatpush1.msra.mxu0 %v123
    %270 = vmatprep.subr.mxu0 %v127
    %271 = vmatpush1.msra.mxu0 %v126
    %272 = vmatprep.subr.mxu0 %v130
    %273 = vmatpush1.msra.mxu0 %v129
    %274 = vmatprep.subr.mxu0 %v133
    %275 = vmatpush1.msra.mxu0 %v132
    %276 = vmatprep.subr.mxu0 %v136
    %277 = vmatpush1.msra.mxu0 %v135
    %278 = vmatprep.subr.mxu0 %v139
    %279 = vmatpush1.msra.mxu0 %v138
    %280 = vmatprep.subr.mxu0 %v142
    %281 = vmatpush1.msra.mxu0 %v141
    %282 = vmatprep.subr.mxu0 %v145
    %283 = vmatpush1.msra.mxu0 %v144
    %284 = vmatprep.subr.mxu0 %v148
    %285 = vmatpush1.msra.mxu0 %v147
    %286 = vmatprep.subr.mxu0 %v151
    %287 = vmatpush1.msra.mxu0 %v150
    %288 = vmatprep.subr.mxu0 %v154
    %289 = vmatpush1.msra.mxu0 %v153
    %290 = vmatprep.subr.mxu0 %v157
    %291 = vmatpush1.msra.mxu0 %v156
    %292 = vmatprep.subr.mxu0 %v160
    %293 = vmatpush1.msra.mxu0 %v159
    %294 = vmatprep.mubr.f32.mxu0 %v223
    %295 = vmatmul.mubr.f32.gmra.mrb[0].mxu0 %v222
    %v296 = vpop.f32.mrb[0].mxu0
    %v297 = vadd.f32 0.0, %v296
    %v298 = vpop.f32.mrb[0].mxu0
    %v299 = vadd.f32 0.0, %v298
    %300 = vdwg.mxu0
    %301 = vmatprep.subr.mxu0 %v163
    %302 = vmatpush1.msra.mxu0 %v162
    %303 = vmatprep.subr.mxu0 %v166
    %304 = vmatpush1.msra.mxu0 %v165
    %305 = vmatprep.subr.mxu0 %v169
    %306 = vmatpush1.msra.mxu0 %v168
    %307 = vmatprep.subr.mxu0 %v172
    %308 = vmatpush1.msra.mxu0 %v171
    %309 = vmatprep.subr.mxu0 %v175
    %310 = vmatpush1.msra.mxu0 %v174
    %311 = vmatprep.subr.mxu0 %v178
    %312 = vmatpush1.msra.mxu0 %v177
    %313 = vmatprep.subr.mxu0 %v181
    %314 = vmatpush1.msra.mxu0 %v180
    %315 = vmatprep.subr.mxu0 %v184
    %316 = vmatpush1.msra.mxu0 %v183
    %317 = vmatprep.subr.mxu0 0.0
    %318 = vmatpush1.msra.mxu0 0.0
    %319 = vmatprep.subr.mxu0 0.0
    %320 = vmatpush1.msra.mxu0 0.0
    %321 = vmatprep.subr.mxu0 0.0
    %322 = vmatpush1.msra.mxu0 0.0
    %323 = vmatprep.subr.mxu0 0.0
    %324 = vmatpush1.msra.mxu0 0.0
    %325 = vmatprep.subr.mxu0 0.0
    %326 = vmatpush1.msra.mxu0 0.0
    %327 = vmatprep.subr.mxu0 0.0
    %328 = vmatpush1.msra.mxu0 0.0
    %329 = vmatprep.subr.mxu0 0.0
    %330 = vmatpush1.msra.mxu0 0.0
    %331 = vmatprep.subr.mxu0 0.0
    %332 = vmatpush1.msra.mxu0 0.0
    %333 = vmatprep.subr.mxu0 0.0
    %334 = vmatpush1.msra.mxu0 0.0
    %335 = vmatprep.subr.mxu0 0.0
    %336 = vmatpush1.msra.mxu0 0.0
    %337 = vmatprep.subr.mxu0 0.0
    %338 = vmatpush1.msra.mxu0 0.0
    %339 = vmatprep.subr.mxu0 0.0
    %340 = vmatpush1.msra.mxu0 0.0
    %341 = vmatprep.subr.mxu0 0.0
    %342 = vmatpush1.msra.mxu0 0.0
    %343 = vmatprep.subr.mxu0 0.0
    %344 = vmatpush1.msra.mxu0 0.0
    %345 = vmatprep.subr.mxu0 0.0
    %346 = vmatpush1.msra.mxu0 0.0
    %347 = vmatprep.subr.mxu0 0.0
    %348 = vmatpush1.msra.mxu0 0.0
    %349 = vmatprep.subr.mxu0 0.0
    %350 = vmatpush1.msra.mxu0 0.0
    %351 = vmatprep.subr.mxu0 0.0
    %352 = vmatpush1.msra.mxu0 0.0
    %353 = vmatprep.subr.mxu0 0.0
    %354 = vmatpush1.msra.mxu0 0.0
    %355 = vmatprep.subr.mxu0 0.0
    %356 = vmatpush1.msra.mxu0 0.0
    %357 = vmatprep.subr.mxu0 0.0
    %358 = vmatpush1.msra.mxu0 0.0
    %359 = vmatprep.subr.mxu0 0.0
    %360 = vmatpush1.msra.mxu0 0.0
    %361 = vmatprep.subr.mxu0 0.0
    %362 = vmatpush1.msra.mxu0 0.0
    %363 = vmatprep.subr.mxu0 0.0
    %364 = vmatpush1.msra.mxu0 0.0
    %365 = vmatprep.mubr.f32.mxu0 0.0
    %366 = vmatmul.mubr.f32.gmra.mrb[0].mxu0 %v228
    %v367 = vpop.f32.mrb[0].mxu0
    %v368 = vadd.f32 %v297, %v367
    %v369 = vpop.f32.mrb[0].mxu0
    %v370 = vadd.f32 %v299, %v369
    %371 = vdwg.mxu0
    %372 = vmatprep.subr.mxu0 0.0
    %373 = vmatpush1.msra.mxu0 %v68
    %374 = vmatprep.subr.mxu0 0.0
    %375 = vmatpush1.msra.mxu0 %v71
    %376 = vmatprep.subr.mxu0 0.0
    %377 = vmatpush1.msra.mxu0 %v74
    %378 = vmatprep.subr.mxu0 0.0
    %379 = vmatpush1.msra.mxu0 %v77
    %380 = vmatprep.subr.mxu0 0.0
    %381 = vmatpush1.msra.mxu0 %v80
    %382 = vmatprep.subr.mxu0 0.0
    %383 = vmatpush1.msra.mxu0 %v83
    %384 = vmatprep.subr.mxu0 0.0
    %385 = vmatpush1.msra.mxu0 %v86
    %386 = vmatprep.subr.mxu0 0.0
    %387 = vmatpush1.msra.mxu0 %v89
    %388 = vmatprep.subr.mxu0 0.0
    %389 = vmatpush1.msra.mxu0 %v92
    %390 = vmatprep.subr.mxu0 0.0
    %391 = vmatpush1.msra.mxu0 %v95
    %392 = vmatprep.subr.mxu0 0.0
    %393 = vmatpush1.msra.mxu0 %v98
    %394 = vmatprep.subr.mxu0 0.0
    %395 = vmatpush1.msra.mxu0 %v101
    %396 = vmatprep.subr.mxu0 0.0
    %397 = vmatpush1.msra.mxu0 %v104
    %398 = vmatprep.subr.mxu0 0.0
    %399 = vmatpush1.msra.mxu0 %v107
    %400 = vmatprep.subr.mxu0 0.0
    %401 = vmatpush1.msra.mxu0 %v110
    %402 = vmatprep.subr.mxu0 0.0
    %403 = vmatpush1.msra.mxu0 %v113
    %404 = vmatprep.subr.mxu0 0.0
    %405 = vmatpush1.msra.mxu0 %v116
    %406 = vmatprep.subr.mxu0 0.0
    %407 = vmatpush1.msra.mxu0 %v119
    %408 = vmatprep.subr.mxu0 0.0
    %409 = vmatpush1.msra.mxu0 %v122
    %410 = vmatprep.subr.mxu0 0.0
    %411 = vmatpush1.msra.mxu0 %v125
    %412 = vmatprep.subr.mxu0 0.0
    %413 = vmatpush1.msra.mxu0 %v128
    %414 = vmatprep.subr.mxu0 0.0
    %415 = vmatpush1.msra.mxu0 %v131
    %416 = vmatprep.subr.mxu0 0.0
    %417 = vmatpush1.msra.mxu0 %v134
    %418 = vmatprep.subr.mxu0 0.0
    %419 = vmatpush1.msra.mxu0 %v137
    %420 = vmatprep.subr.mxu0 0.0
    %421 = vmatpush1.msra.mxu0 %v140
    %422 = vmatprep.subr.mxu0 0.0
    %423 = vmatpush1.msra.mxu0 %v143
    %424 = vmatprep.subr.mxu0 0.0
    %425 = vmatpush1.msra.mxu0 %v146
    %426 = vmatprep.subr.mxu0 0.0
    %427 = vmatpush1.msra.mxu0 %v149
    %428 = vmatprep.subr.mxu0 0.0
    %429 = vmatpush1.msra.mxu0 %v152
    %430 = vmatprep.subr.mxu0 0.0
    %431 = vmatpush1.msra.mxu0 %v155
    %432 = vmatprep.subr.mxu0 0.0
    %433 = vmatpush1.msra.mxu0 %v158
    %434 = vmatprep.subr.mxu0 0.0
    %435 = vmatpush1.msra.mxu0 %v161
    %436 = vmatprep.mubr.f32.mxu0 %v223
    %437 = vmatmul.mubr.f32.gmra.mrb[0].mxu0 %v222
    %v438 = vpop.f32.mrb[0].mxu0
    %v439 = vadd.f32 0.0, %v438
    %v440 = vpop.f32.mrb[0].mxu0
    %441 = vdwg.mxu0
    %442 = vmatprep.subr.mxu0 0.0
    %443 = vmatpush1.msra.mxu0 %v164
    %444 = vmatprep.subr.mxu0 0.0
    %445 = vmatpush1.msra.mxu0 %v167
    %446 = vmatprep.subr.mxu0 0.0
    %447 = vmatpush1.msra.mxu0 %v170
    %448 = vmatprep.subr.mxu0 0.0
    %449 = vmatpush1.msra.mxu0 %v173
    %450 = vmatprep.subr.mxu0 0.0
    %451 = vmatpush1.msra.mxu0 %v176
    %452 = vmatprep.subr.mxu0 0.0
    %453 = vmatpush1.msra.mxu0 %v179
    %454 = vmatprep.subr.mxu0 0.0
    %455 = vmatpush1.msra.mxu0 %v182
    %456 = vmatprep.subr.mxu0 0.0
    %457 = vmatpush1.msra.mxu0 %v185
    %458 = vmatprep.subr.mxu0 0.0
    %459 = vmatpush1.msra.mxu0 0.0
    %460 = vmatprep.subr.mxu0 0.0
    %461 = vmatpush1.msra.mxu0 0.0
    %462 = vmatprep.subr.mxu0 0.0
    %463 = vmatpush1.msra.mxu0 0.0
    %464 = vmatprep.subr.mxu0 0.0
    %465 = vmatpush1.msra.mxu0 0.0
    %466 = vmatprep.subr.mxu0 0.0
    %467 = vmatpush1.msra.mxu0 0.0
    %468 = vmatprep.subr.mxu0 0.0
    %469 = vmatpush1.msra.mxu0 0.0
    %470 = vmatprep.subr.mxu0 0.0
    %471 = vmatpush1.msra.mxu0 0.0
    %472 = vmatprep.subr.mxu0 0.0
    %473 = vmatpush1.msra.mxu0 0.0
    %474 = vmatprep.subr.mxu0 0.0
    %475 = vmatpush1.msra.mxu0 0.0
    %476 = vmatprep.subr.mxu0 0.0
    %477 = vmatpush1.msra.mxu0 0.0
    %478 = vmatprep.subr.mxu0 0.0
    %479 = vmatpush1.msra.mxu0 0.0
    %480 = vmatprep.subr.mxu0 0.0
    %481 = vmatpush1.msra.mxu0 0.0
    %482 = vmatprep.subr.mxu0 0.0
    %483 = vmatpush1.msra.mxu0 0.0
    %484 = vmatprep.subr.mxu0 0.0
    %485 = vmatpush1.msra.mxu0 0.0
    %486 = vmatprep.subr.mxu0 0.0
    %487 = vmatpush1.msra.mxu0 0.0
    %488 = vmatprep.subr.mxu0 0.0
    %489 = vmatpush1.msra.mxu0 0.0
    %490 = vmatprep.subr.mxu0 0.0
    %491 = vmatpush1.msra.mxu0 0.0
    %492 = vmatprep.subr.mxu0 0.0
    %493 = vmatpush1.msra.mxu0 0.0
    %494 = vmatprep.subr.mxu0 0.0
    %495 = vmatpush1.msra.mxu0 0.0
    %496 = vmatprep.subr.mxu0 0.0
    %497 = vmatpush1.msra.mxu0 0.0
    %498 = vmatprep.subr.mxu0 0.0
    %499 = vmatpush1.msra.mxu0 0.0
    %500 = vmatprep.subr.mxu0 0.0
    %501 = vmatpush1.msra.mxu0 0.0
    %502 = vmatprep.subr.mxu0 0.0
    %503 = vmatpush1.msra.mxu0 0.0
    %504 = vmatprep.subr.mxu0 0.0
    %505 = vmatpush1.msra.mxu0 0.0
    %506 = vmatprep.mubr.f32.mxu0 0.0
    %507 = vmatmul.mubr.f32.gmra.mrb[0].mxu0 %v228
    %v508 = vpop.f32.mrb[0].mxu0
    %v509 = vadd.f32 %v439, %v508
    %v510 = vpop.f32.mrb[0].mxu0
    %511 = vdwg.mxu0
    %v515 = vcombine.low %v368, %v370
    %v516 = vcombine.high %v368, %v370
    %v517 = vcombine.high %v509, %v509
    %v519 = vunpack.c.l.s4 1983009808
    %v520 = vunpack.c.0.s8 %v519
    %v521 = vlaneseq
    %v522 = vshrl.u32 %v521, 7
    %v523 = vsub.s32 %v520, %v522
    %v524 = vrot.slane %v515, %v523
    %v526 = vunpack.c.l.s4 1983009808
    %v527 = vunpack.c.0.s8 %v526
    %v528 = vlaneseq
    %v529 = vshrl.u32 %v528, 7
    %v530 = vsub.s32 %v527, %v529
    %v531 = vrot.slane %v516, %v530
    %v533 = vunpack.c.l.s4 1983009808
    %v534 = vunpack.c.0.s8 %v533
    %v535 = vlaneseq
    %v536 = vshrl.u32 %v535, 7
    %v537 = vsub.s32 %v534, %v536
    %v538 = vrot.slane %v509, %v537
    %v540 = vunpack.c.l.s4 1983009808
    %v541 = vunpack.c.0.s8 %v540
    %v542 = vlaneseq
    %v543 = vshrl.u32 %v542, 7
    %v544 = vsub.s32 %v541, %v543
    %v545 = vrot.slane %v517, %v544
    %v546 = vcombine.low %v524, %v538
    %v547 = vcombine.high %v524, %v538
    %v548 = vcombine.low %v531, %v545
    %v549 = vcombine.high %v531, %v545
    %v554 = vmul.f32 %v62, %v546
    %v555 = vmul.f32 %v63, %v547
    %v556 = vmul.f32 %v64, %v548
    %v557 = vmul.f32 %v65, %v549
    %vm558 = vcmp.gt.f32.partialorder %v554, 0.0
    %vm559 = vcmp.gt.f32.partialorder %v555, 0.0
    %vm560 = vcmp.gt.f32.partialorder %v556, 0.0
    %vm561 = vcmp.gt.f32.partialorder %v557, 0.0
    %v562 = vmul.f32 %v554, 0.01
    %v563 = vmul.f32 %v555, 0.01
    %v564 = vmul.f32 %v556, 0.01
    %v565 = vmul.f32 %v557, 0.01
    %v566 = vsel %vm558, %v554, %v562
    %v567 = vsel %vm559, %v555, %v563
    %v568 = vsel %vm560, %v556, %v564
    %v569 = vsel %vm561, %v557, %v565
    %v574 = vcombine.low %v566, %v567
    %v575 = vcombine.high %v566, %v567
    %v576 = vcombine.low %v568, %v569
    %v577 = vcombine.high %v568, %v569
    %v579 = vunpack.c.l.s4 1983009808
    %v580 = vunpack.c.0.s8 %v579
    %v581 = vlaneseq
    %v582 = vshrl.u32 %v581, 7
    %v583 = vsub.s32 %v580, %v582
    %v584 = vrot.slane %v574, %v583
    %v586 = vunpack.c.l.s4 1983009808
    %v587 = vunpack.c.0.s8 %v586
    %v588 = vlaneseq
    %v589 = vshrl.u32 %v588, 7
    %v590 = vsub.s32 %v587, %v589
    %v591 = vrot.slane %v575, %v590
    %v593 = vunpack.c.l.s4 1983009808
    %v594 = vunpack.c.0.s8 %v593
    %v595 = vlaneseq
    %v596 = vshrl.u32 %v595, 7
    %v597 = vsub.s32 %v594, %v596
    %v598 = vrot.slane %v576, %v597
    %v600 = vunpack.c.l.s4 1983009808
    %v601 = vunpack.c.0.s8 %v600
    %v602 = vlaneseq
    %v603 = vshrl.u32 %v602, 7
    %v604 = vsub.s32 %v601, %v603
    %v605 = vrot.slane %v577, %v604
    %v606 = vcombine.low %v584, %v598
    %v607 = vcombine.high %v584, %v598
    %v608 = vcombine.low %v591, %v605
    %v611 = vsel %vm227, %v608, 0
    %613 = vmatprep.subr.mxu0 %v67
    %614 = vmatpush1.msra.mxu0 %v66
    %615 = vmatprep.subr.mxu0 %v70
    %616 = vmatpush1.msra.mxu0 %v69
    %617 = vmatprep.subr.mxu0 %v73
    %618 = vmatpush1.msra.mxu0 %v72
    %619 = vmatprep.subr.mxu0 %v76
    %620 = vmatpush1.msra.mxu0 %v75
    %621 = vmatprep.subr.mxu0 %v79
    %622 = vmatpush1.msra.mxu0 %v78
    %623 = vmatprep.subr.mxu0 %v82
    %624 = vmatpush1.msra.mxu0 %v81
    %625 = vmatprep.subr.mxu0 %v85
    %626 = vmatpush1.msra.mxu0 %v84
    %627 = vmatprep.subr.mxu0 %v88
    %628 = vmatpush1.msra.mxu0 %v87
    %629 = vmatprep.subr.mxu0 %v91
    %630 = vmatpush1.msra.mxu0 %v90
    %631 = vmatprep.subr.mxu0 %v94
    %632 = vmatpush1.msra.mxu0 %v93
    %633 = vmatprep.subr.mxu0 %v97
    %634 = vmatpush1.msra.mxu0 %v96
    %635 = vmatprep.subr.mxu0 %v100
    %636 = vmatpush1.msra.mxu0 %v99
    %637 = vmatprep.subr.mxu0 %v103
    %638 = vmatpush1.msra.mxu0 %v102
    %639 = vmatprep.subr.mxu0 %v106
    %640 = vmatpush1.msra.mxu0 %v105
    %641 = vmatprep.subr.mxu0 %v109
    %642 = vmatpush1.msra.mxu0 %v108
    %643 = vmatprep.subr.mxu0 %v112
    %644 = vmatpush1.msra.mxu0 %v111
    %645 = vmatprep.subr.mxu0 %v115
    %646 = vmatpush1.msra.mxu0 %v114
    %647 = vmatprep.subr.mxu0 %v118
    %648 = vmatpush1.msra.mxu0 %v117
    %649 = vmatprep.subr.mxu0 %v121
    %650 = vmatpush1.msra.mxu0 %v120
    %651 = vmatprep.subr.mxu0 %v124
    %652 = vmatpush1.msra.mxu0 %v123
    %653 = vmatprep.subr.mxu0 %v127
    %654 = vmatpush1.msra.mxu0 %v126
    %655 = vmatprep.subr.mxu0 %v130
    %656 = vmatpush1.msra.mxu0 %v129
    %657 = vmatprep.subr.mxu0 %v133
    %658 = vmatpush1.msra.mxu0 %v132
    %659 = vmatprep.subr.mxu0 %v136
    %660 = vmatpush1.msra.mxu0 %v135
    %661 = vmatprep.subr.mxu0 %v139
    %662 = vmatpush1.msra.mxu0 %v138
    %663 = vmatprep.subr.mxu0 %v142
    %664 = vmatpush1.msra.mxu0 %v141
    %665 = vmatprep.subr.mxu0 %v145
    %666 = vmatpush1.msra.mxu0 %v144
    %667 = vmatprep.subr.mxu0 %v148
    %668 = vmatpush1.msra.mxu0 %v147
    %669 = vmatprep.subr.mxu0 %v151
    %670 = vmatpush1.msra.mxu0 %v150
    %671 = vmatprep.subr.mxu0 %v154
    %672 = vmatpush1.msra.mxu0 %v153
    %673 = vmatprep.subr.mxu0 %v157
    %674 = vmatpush1.msra.mxu0 %v156
    %675 = vmatprep.subr.mxu0 %v160
    %676 = vmatpush1.msra.mxu0 %v159
    %677 = vmatprep.mubr.f32.mxu0 %v607
    %678 = vmatmul.mubr.f32.gmra.mrb[0].mxu0 %v606
    %v679 = vpop.f32.mrb[0].mxu0
    %v680 = vadd.f32 0.0, %v679
    %v681 = vpop.f32.mrb[0].mxu0
    %v682 = vadd.f32 0.0, %v681
    %683 = vdwg.mxu0
    %684 = vmatprep.subr.mxu0 %v163
    %685 = vmatpush1.msra.mxu0 %v162
    %686 = vmatprep.subr.mxu0 %v166
    %687 = vmatpush1.msra.mxu0 %v165
    %688 = vmatprep.subr.mxu0 %v169
    %689 = vmatpush1.msra.mxu0 %v168
    %690 = vmatprep.subr.mxu0 %v172
    %691 = vmatpush1.msra.mxu0 %v171
    %692 = vmatprep.subr.mxu0 %v175
    %693 = vmatpush1.msra.mxu0 %v174
    %694 = vmatprep.subr.mxu0 %v178
    %695 = vmatpush1.msra.mxu0 %v177
    %696 = vmatprep.subr.mxu0 %v181
    %697 = vmatpush1.msra.mxu0 %v180
    %698 = vmatprep.subr.mxu0 %v184
    %699 = vmatpush1.msra.mxu0 %v183
    %700 = vmatprep.subr.mxu0 0.0
    %701 = vmatpush1.msra.mxu0 0.0
    %702 = vmatprep.subr.mxu0 0.0
    %703 = vmatpush1.msra.mxu0 0.0
    %704 = vmatprep.subr.mxu0 0.0
    %705 = vmatpush1.msra.mxu0 0.0
    %706 = vmatprep.subr.mxu0 0.0
    %707 = vmatpush1.msra.mxu0 0.0
    %708 = vmatprep.subr.mxu0 0.0
    %709 = vmatpush1.msra.mxu0 0.0
    %710 = vmatprep.subr.mxu0 0.0
    %711 = vmatpush1.msra.mxu0 0.0
    %712 = vmatprep.subr.mxu0 0.0
    %713 = vmatpush1.msra.mxu0 0.0
    %714 = vmatprep.subr.mxu0 0.0
    %715 = vmatpush1.msra.mxu0 0.0
    %716 = vmatprep.subr.mxu0 0.0
    %717 = vmatpush1.msra.mxu0 0.0
    %718 = vmatprep.subr.mxu0 0.0
    %719 = vmatpush1.msra.mxu0 0.0
    %720 = vmatprep.subr.mxu0 0.0
    %721 = vmatpush1.msra.mxu0 0.0
    %722 = vmatprep.subr.mxu0 0.0
    %723 = vmatpush1.msra.mxu0 0.0
    %724 = vmatprep.subr.mxu0 0.0
    %725 = vmatpush1.msra.mxu0 0.0
    %726 = vmatprep.subr.mxu0 0.0
    %727 = vmatpush1.msra.mxu0 0.0
    %728 = vmatprep.subr.mxu0 0.0
    %729 = vmatpush1.msra.mxu0 0.0
    %730 = vmatprep.subr.mxu0 0.0
    %731 = vmatpush1.msra.mxu0 0.0
    %732 = vmatprep.subr.mxu0 0.0
    %733 = vmatpush1.msra.mxu0 0.0
    %734 = vmatprep.subr.mxu0 0.0
    %735 = vmatpush1.msra.mxu0 0.0
    %736 = vmatprep.subr.mxu0 0.0
    %737 = vmatpush1.msra.mxu0 0.0
    %738 = vmatprep.subr.mxu0 0.0
    %739 = vmatpush1.msra.mxu0 0.0
    %740 = vmatprep.subr.mxu0 0.0
    %741 = vmatpush1.msra.mxu0 0.0
    %742 = vmatprep.subr.mxu0 0.0
    %743 = vmatpush1.msra.mxu0 0.0
    %744 = vmatprep.subr.mxu0 0.0
    %745 = vmatpush1.msra.mxu0 0.0
    %746 = vmatprep.subr.mxu0 0.0
    %747 = vmatpush1.msra.mxu0 0.0
    %748 = vmatprep.mubr.f32.mxu0 0.0
    %749 = vmatmul.mubr.f32.gmra.mrb[0].mxu0 %v611
    %v750 = vpop.f32.mrb[0].mxu0
    %v751 = vadd.f32 %v680, %v750
    %v752 = vpop.f32.mrb[0].mxu0
    %v753 = vadd.f32 %v682, %v752
    %754 = vdwg.mxu0
    %755 = vmatprep.subr.mxu0 0.0
    %756 = vmatpush1.msra.mxu0 %v68
    %757 = vmatprep.subr.mxu0 0.0
    %758 = vmatpush1.msra.mxu0 %v71
    %759 = vmatprep.subr.mxu0 0.0
    %760 = vmatpush1.msra.mxu0 %v74
    %761 = vmatprep.subr.mxu0 0.0
    %762 = vmatpush1.msra.mxu0 %v77
    %763 = vmatprep.subr.mxu0 0.0
    %764 = vmatpush1.msra.mxu0 %v80
    %765 = vmatprep.subr.mxu0 0.0
    %766 = vmatpush1.msra.mxu0 %v83
    %767 = vmatprep.subr.mxu0 0.0
    %768 = vmatpush1.msra.mxu0 %v86
    %769 = vmatprep.subr.mxu0 0.0
    %770 = vmatpush1.msra.mxu0 %v89
    %771 = vmatprep.subr.mxu0 0.0
    %772 = vmatpush1.msra.mxu0 %v92
    %773 = vmatprep.subr.mxu0 0.0
    %774 = vmatpush1.msra.mxu0 %v95
    %775 = vmatprep.subr.mxu0 0.0
    %776 = vmatpush1.msra.mxu0 %v98
    %777 = vmatprep.subr.mxu0 0.0
    %778 = vmatpush1.msra.mxu0 %v101
    %779 = vmatprep.subr.mxu0 0.0
    %780 = vmatpush1.msra.mxu0 %v104
    %781 = vmatprep.subr.mxu0 0.0
    %782 = vmatpush1.msra.mxu0 %v107
    %783 = vmatprep.subr.mxu0 0.0
    %784 = vmatpush1.msra.mxu0 %v110
    %785 = vmatprep.subr.mxu0 0.0
    %786 = vmatpush1.msra.mxu0 %v113
    %787 = vmatprep.subr.mxu0 0.0
    %788 = vmatpush1.msra.mxu0 %v116
    %789 = vmatprep.subr.mxu0 0.0
    %790 = vmatpush1.msra.mxu0 %v119
    %791 = vmatprep.subr.mxu0 0.0
    %792 = vmatpush1.msra.mxu0 %v122
    %793 = vmatprep.subr.mxu0 0.0
    %794 = vmatpush1.msra.mxu0 %v125
    %795 = vmatprep.subr.mxu0 0.0
    %796 = vmatpush1.msra.mxu0 %v128
    %797 = vmatprep.subr.mxu0 0.0
    %798 = vmatpush1.msra.mxu0 %v131
    %799 = vmatprep.subr.mxu0 0.0
    %800 = vmatpush1.msra.mxu0 %v134
    %801 = vmatprep.subr.mxu0 0.0
    %802 = vmatpush1.msra.mxu0 %v137
    %803 = vmatprep.subr.mxu0 0.0
    %804 = vmatpush1.msra.mxu0 %v140
    %805 = vmatprep.subr.mxu0 0.0
    %806 = vmatpush1.msra.mxu0 %v143
    %807 = vmatprep.subr.mxu0 0.0
    %808 = vmatpush1.msra.mxu0 %v146
    %809 = vmatprep.subr.mxu0 0.0
    %810 = vmatpush1.msra.mxu0 %v149
    %811 = vmatprep.subr.mxu0 0.0
    %812 = vmatpush1.msra.mxu0 %v152
    %813 = vmatprep.subr.mxu0 0.0
    %814 = vmatpush1.msra.mxu0 %v155
    %815 = vmatprep.subr.mxu0 0.0
    %816 = vmatpush1.msra.mxu0 %v158
    %817 = vmatprep.subr.mxu0 0.0
    %818 = vmatpush1.msra.mxu0 %v161
    %819 = vmatprep.mubr.f32.mxu0 %v607
    %820 = vmatmul.mubr.f32.gmra.mrb[0].mxu0 %v606
    %v821 = vpop.f32.mrb[0].mxu0
    %v822 = vadd.f32 0.0, %v821
    %v823 = vpop.f32.mrb[0].mxu0
    %824 = vdwg.mxu0
    %825 = vmatprep.subr.mxu0 0.0
    %826 = vmatpush1.msra.mxu0 %v164
    %827 = vmatprep.subr.mxu0 0.0
    %828 = vmatpush1.msra.mxu0 %v167
    %829 = vmatprep.subr.mxu0 0.0
    %830 = vmatpush1.msra.mxu0 %v170
    %831 = vmatprep.subr.mxu0 0.0
    %832 = vmatpush1.msra.mxu0 %v173
    %833 = vmatprep.subr.mxu0 0.0
    %834 = vmatpush1.msra.mxu0 %v176
    %835 = vmatprep.subr.mxu0 0.0
    %836 = vmatpush1.msra.mxu0 %v179
    %837 = vmatprep.subr.mxu0 0.0
    %838 = vmatpush1.msra.mxu0 %v182
    %839 = vmatprep.subr.mxu0 0.0
    %840 = vmatpush1.msra.mxu0 %v185
    %841 = vmatprep.subr.mxu0 0.0
    %842 = vmatpush1.msra.mxu0 0.0
    %843 = vmatprep.subr.mxu0 0.0
    %844 = vmatpush1.msra.mxu0 0.0
    %845 = vmatprep.subr.mxu0 0.0
    %846 = vmatpush1.msra.mxu0 0.0
    %847 = vmatprep.subr.mxu0 0.0
    %848 = vmatpush1.msra.mxu0 0.0
    %849 = vmatprep.subr.mxu0 0.0
    %850 = vmatpush1.msra.mxu0 0.0
    %851 = vmatprep.subr.mxu0 0.0
    %852 = vmatpush1.msra.mxu0 0.0
    %853 = vmatprep.subr.mxu0 0.0
    %854 = vmatpush1.msra.mxu0 0.0
    %855 = vmatprep.subr.mxu0 0.0
    %856 = vmatpush1.msra.mxu0 0.0
    %857 = vmatprep.subr.mxu0 0.0
    %858 = vmatpush1.msra.mxu0 0.0
    %859 = vmatprep.subr.mxu0 0.0
    %860 = vmatpush1.msra.mxu0 0.0
    %861 = vmatprep.subr.mxu0 0.0
    %862 = vmatpush1.msra.mxu0 0.0
    %863 = vmatprep.subr.mxu0 0.0
    %864 = vmatpush1.msra.mxu0 0.0
    %865 = vmatprep.subr.mxu0 0.0
    %866 = vmatpush1.msra.mxu0 0.0
    %867 = vmatprep.subr.mxu0 0.0
    %868 = vmatpush1.msra.mxu0 0.0
    %869 = vmatprep.subr.mxu0 0.0
    %870 = vmatpush1.msra.mxu0 0.0
    %871 = vmatprep.subr.mxu0 0.0
    %872 = vmatpush1.msra.mxu0 0.0
    %873 = vmatprep.subr.mxu0 0.0
    %874 = vmatpush1.msra.mxu0 0.0
    %875 = vmatprep.subr.mxu0 0.0
    %876 = vmatpush1.msra.mxu0 0.0
    %877 = vmatprep.subr.mxu0 0.0
    %878 = vmatpush1.msra.mxu0 0.0
    %879 = vmatprep.subr.mxu0 0.0
    %880 = vmatpush1.msra.mxu0 0.0
    %881 = vmatprep.subr.mxu0 0.0
    %882 = vmatpush1.msra.mxu0 0.0
    %883 = vmatprep.subr.mxu0 0.0
    %884 = vmatpush1.msra.mxu0 0.0
    %885 = vmatprep.subr.mxu0 0.0
    %886 = vmatpush1.msra.mxu0 0.0
    %887 = vmatprep.subr.mxu0 0.0
    %888 = vmatpush1.msra.mxu0 0.0
    %889 = vmatprep.mubr.f32.mxu0 0.0
    %890 = vmatmul.mubr.f32.gmra.mrb[0].mxu0 %v611
    %v891 = vpop.f32.mrb[0].mxu0
    %v892 = vadd.f32 %v822, %v891
    %v893 = vpop.f32.mrb[0].mxu0
    %894 = vdwg.mxu0
    %v898 = vcombine.low %v751, %v753
    %v899 = vcombine.high %v751, %v753
    %v900 = vcombine.high %v892, %v892
    %v902 = vunpack.c.l.s4 1983009808
    %v903 = vunpack.c.0.s8 %v902
    %v904 = vlaneseq
    %v905 = vshrl.u32 %v904, 7
    %v906 = vsub.s32 %v903, %v905
    %v907 = vrot.slane %v898, %v906
    %v909 = vunpack.c.l.s4 1983009808
    %v910 = vunpack.c.0.s8 %v909
    %v911 = vlaneseq
    %v912 = vshrl.u32 %v911, 7
    %v913 = vsub.s32 %v910, %v912
    %v914 = vrot.slane %v899, %v913
    %v916 = vunpack.c.l.s4 1983009808
    %v917 = vunpack.c.0.s8 %v916
    %v918 = vlaneseq
    %v919 = vshrl.u32 %v918, 7
    %v920 = vsub.s32 %v917, %v919
    %v921 = vrot.slane %v892, %v920
    %v923 = vunpack.c.l.s4 1983009808
    %v924 = vunpack.c.0.s8 %v923
    %v925 = vlaneseq
    %v926 = vshrl.u32 %v925, 7
    %v927 = vsub.s32 %v924, %v926
    %v928 = vrot.slane %v900, %v927
    %v929 = vcombine.low %v907, %v921
    %v930 = vcombine.high %v907, %v921
    %v931 = vcombine.low %v914, %v928
    %v932 = vcombine.high %v914, %v928
    %v937 = vmul.f32 %v566, %v929
    %v938 = vmul.f32 %v567, %v930
    %v939 = vmul.f32 %v568, %v931
    %v940 = vmul.f32 %v569, %v932
    %vm941 = vcmp.gt.f32.partialorder %v937, 0.0
    %vm942 = vcmp.gt.f32.partialorder %v938, 0.0
    %vm943 = vcmp.gt.f32.partialorder %v939, 0.0
    %vm944 = vcmp.gt.f32.partialorder %v940, 0.0
    %v945 = vmul.f32 %v937, 0.01
    %v946 = vmul.f32 %v938, 0.01
    %v947 = vmul.f32 %v939, 0.01
    %v948 = vmul.f32 %v940, 0.01
    %v949 = vsel %vm941, %v937, %v945
    %v950 = vsel %vm942, %v938, %v946
    %v951 = vsel %vm943, %v939, %v947
    %v952 = vsel %vm944, %v940, %v948
    %957 = vrot.lane.b32.xlu0 %v949, 64
    %v958 = vpop.permute.xlu0 %957
    %959 = vrot.lane.b32.xlu0 %v950, 64
    %v960 = vpop.permute.xlu0 %959
    %961 = vrot.lane.b32.xlu0 %v951, 64
    %v962 = vpop.permute.xlu0 %961
    %963 = vrot.lane.b32.xlu0 %v952, 64
    %v964 = vpop.permute.xlu0 %963
    %v965 = vrot.slane %v958, 2
    %v966 = vrot.slane %v960, 2
    %v967 = vrot.slane %v962, 2
    %v968 = vrot.slane %v964, 2
    %v969 = vsel %vm227, %v958, %v965
    %v970 = vsel %vm227, %v960, %v966
    %v971 = vsel %vm227, %v962, %v967
    %v972 = vsel %vm227, %v964, %v968
    %977 = vst [vmem:[#allocation9] sm:$0xf] %v969
    %978 = vst [vmem:[#allocation9 + $0x4] sm:$0xf] %v970
    %979 = vst [vmem:[#allocation9 + $0x8] sm:$0xf] %v971
    %980 = vst [vmem:[#allocation9 + $0xc] sm:$0xf] %v972
    %981 = vrot.lane.b32.xlu0 %v62, 96
    %v982 = vpop.permute.xlu0 %981
    %983 = vrot.lane.b32.xlu0 %v63, 96
    %v984 = vpop.permute.xlu0 %983
    %985 = vrot.lane.b32.xlu0 %v64, 96
    %v986 = vpop.permute.xlu0 %985
    %987 = vrot.lane.b32.xlu0 %v65, 96
    %v988 = vpop.permute.xlu0 %987
    %v993 = vmul.f32 %v62, %v982
    %v994 = vmul.f32 %v63, %v984
    %v995 = vmul.f32 %v64, %v986
    %v996 = vmul.f32 %v65, %v988
    %v997 = vld [vmem:[#allocation7] sm:$0xff]
    %v998 = vld [vmem:[#allocation7 + $0x8] sm:$0xff]
    %v999 = vld [vmem:[#allocation7 + $0x10] sm:$0xff]
    %v1000 = vld [vmem:[#allocation7 + $0x18] sm:$0xff]
    %v1001 = vld [vmem:[%s3] sm:$0x1]
    %v1003 = vlaneseq
    %v1004 = vshrl.u32 %v1003, 7
    %v1005 = vsub.s32 0, %v1004
    %v1006 = vrot.slane %v1001, %v1005
    %v1012 = vcombine.low %v993, %v994
    %v1013 = vcombine.low %v995, %v996
    %v1015 = vunpack.c.l.s4 1983009808
    %v1016 = vunpack.c.0.s8 %v1015
    %v1017 = vlaneseq
    %v1018 = vshrl.u32 %v1017, 7
    %v1019 = vsub.s32 %v1016, %v1018
    %v1020 = vrot.slane %v1012, %v1019
    %v1022 = vunpack.c.l.s4 1983009808
    %v1023 = vunpack.c.0.s8 %v1022
    %v1024 = vlaneseq
    %v1025 = vshrl.u32 %v1024, 7
    %v1026 = vsub.s32 %v1023, %v1025
    %v1027 = vrot.slane %v1013, %v1026
    %v1028 = vcombine.low %v1020, %v1027
    %vm1029 = vcmask 261120
    %v1030 = vsel %vm1029, %v1028, 0
    %1032 = vmatprep.subr.mxu0 0.0
    %1033 = vmatpush1.msra.mxu0 %v997
    %1034 = vmatprep.subr.mxu0 0.0
    %1035 = vmatpush1.msra.mxu0 %v998
    %1036 = vmatprep.subr.mxu0 0.0
    %1037 = vmatpush1.msra.mxu0 %v999
    %1038 = vmatprep.subr.mxu0 0.0
    %1039 = vmatpush1.msra.mxu0 %v1000
    %1040 = vmatprep.subr.mxu0 0.0
    %1041 = vmatpush1.msra.mxu0 0.0
    %1042 = vmatprep.subr.mxu0 0.0
    %1043 = vmatpush1.msra.mxu0 0.0
    %1044 = vmatprep.subr.mxu0 0.0
    %1045 = vmatpush1.msra.mxu0 0.0
    %1046 = vmatprep.subr.mxu0 0.0
    %1047 = vmatpush1.msra.mxu0 0.0
    %1048 = vmatprep.subr.mxu0 0.0
    %1049 = vmatpush1.msra.mxu0 0.0
    %1050 = vmatprep.subr.mxu0 0.0
    %1051 = vmatpush1.msra.mxu0 0.0
    %1052 = vmatprep.subr.mxu0 0.0
    %1053 = vmatpush1.msra.mxu0 0.0
    %1054 = vmatprep.subr.mxu0 0.0
    %1055 = vmatpush1.msra.mxu0 0.0
    %1056 = vmatprep.subr.mxu0 0.0
    %1057 = vmatpush1.msra.mxu0 0.0
    %1058 = vmatprep.subr.mxu0 0.0
    %1059 = vmatpush1.msra.mxu0 0.0
    %1060 = vmatprep.subr.mxu0 0.0
    %1061 = vmatpush1.msra.mxu0 0.0
    %1062 = vmatprep.subr.mxu0 0.0
    %1063 = vmatpush1.msra.mxu0 0.0
    %1064 = vmatprep.subr.mxu0 0.0
    %1065 = vmatpush1.msra.mxu0 0.0
    %1066 = vmatprep.subr.mxu0 0.0
    %1067 = vmatpush1.msra.mxu0 0.0
    %1068 = vmatprep.subr.mxu0 0.0
    %1069 = vmatpush1.msra.mxu0 0.0
    %1070 = vmatprep.subr.mxu0 0.0
    %1071 = vmatpush1.msra.mxu0 0.0
    %1072 = vmatprep.subr.mxu0 0.0
    %1073 = vmatpush1.msra.mxu0 0.0
    %1074 = vmatprep.subr.mxu0 0.0
    %1075 = vmatpush1.msra.mxu0 0.0
    %1076 = vmatprep.subr.mxu0 0.0
    %1077 = vmatpush1.msra.mxu0 0.0
    %1078 = vmatprep.subr.mxu0 0.0
    %1079 = vmatpush1.msra.mxu0 0.0
    %1080 = vmatprep.subr.mxu0 0.0
    %1081 = vmatpush1.msra.mxu0 0.0
    %1082 = vmatprep.subr.mxu0 0.0
    %1083 = vmatpush1.msra.mxu0 0.0
    %1084 = vmatprep.subr.mxu0 0.0
    %1085 = vmatpush1.msra.mxu0 0.0
    %1086 = vmatprep.subr.mxu0 0.0
    %1087 = vmatpush1.msra.mxu0 0.0
    %1088 = vmatprep.subr.mxu0 0.0
    %1089 = vmatpush1.msra.mxu0 0.0
    %1090 = vmatprep.subr.mxu0 0.0
    %1091 = vmatpush1.msra.mxu0 0.0
    %1092 = vmatprep.subr.mxu0 0.0
    %1093 = vmatpush1.msra.mxu0 0.0
    %1094 = vmatprep.subr.mxu0 0.0
    %1095 = vmatpush1.msra.mxu0 0.0
    %1096 = vmatprep.mubr.f32.mxu0 0.0
    %1097 = vmatmul.mubr.f32.gmra.mrb[0].mxu0 %v1030
    %v1098 = vpop.f32.mrb[0].mxu0
    %v1099 = vadd.f32 %v1006, %v1098
    %v1100 = vpop.f32.mrb[0].mxu0
    %1101 = vdwg.mxu0
    %1102 = vst.msk [vmem:[#allocation8] sm:$0xff] %vm1029, %v1099
    // Predicated region
    $region30: #{tpu_custom_call.1} parent=1 // pred_check
      _
    $region31: #{tpu_custom_call.1} parent=1 // pred_check_branch
      %1104 = sbr.rel (0) target = $region33
    $region32: #{tpu_custom_call.1} parent=1 // pred_region
      %s1106 = ssub.s32 128, 32
      %1107 = vsyncadd [#allocation4], %s1106
      %s1108 = sshll.u32 [#allocation8], 4
      %s1109 = int_to_ptr.vmem [resolvable:$true] %s1108
      %1114 = dma.vmem_to_hbm [thread:$0]  %s1109, 32, %s4, [#allocation4], 32, 32, 2
    $region33: #{tpu_custom_call.1} parent=1 // pred_fallthru
      _
    // Predicated region
    $region34: #{tpu_custom_call.1} parent=1 // pred_check
      _
    $region35: #{tpu_custom_call.1} parent=1 // pred_check_branch
      %1116 = sbr.rel (0) target = $region37
    $region36: #{tpu_custom_call.1} parent=1 // pred_region
      %s1118 = ssub.s32 256, 64
      %1119 = vsyncadd [#allocation10], %s1118
      %s1120 = sshll.u32 [#allocation9], 4
      %s1121 = int_to_ptr.vmem [resolvable:$true] %s1120
      %1126 = dma.vmem_to_hbm [thread:$0]  %s1121, 64, %s5, [#allocation10], 64, 64, 4
    $region37: #{tpu_custom_call.1} parent=1 // pred_fallthru
      _
    // Predicated region
    $region38: #{tpu_custom_call.1} parent=1 // pred_check
      _
    $region39: #{tpu_custom_call.1} parent=1 // pred_check_branch
      %1128 = sbr.rel (0) target = $region41
    $region40: #{tpu_custom_call.1} parent=1 // pred_region
      %1129 = dma.done [#allocation4], 128
    $region41: #{tpu_custom_call.1} parent=1 // pred_fallthru
      _
    // Predicated region
    $region42: #{tpu_custom_call.1} parent=1 // pred_check
      _
    $region43: #{tpu_custom_call.1} parent=1 // pred_check_branch
      %1131 = sbr.rel (0) target = $region45
    $region44: #{tpu_custom_call.1} parent=1 // pred_region
      %1132 = dma.done [#allocation10], 256
    $region45: #{tpu_custom_call.1} parent=1 // pred_fallthru
      _
    %1133 = vsyncpa [#allocation3], 1
    %1134 = vsyncpa [#allocation6], 1
    %1135 = vsyncpa [#allocation4], 1
    %1136 = vsyncpa [#allocation10], 1

</llo_original>
